<compile_context>
chip_gen: v5e
topology: v5e:2x2
jax: 0.10.0
libtpu: 0.0.40
codegen_flags: <defaults>
</compile_context>

<pallas_src>
import jax
import jax.numpy as jnp
from jax.experimental import pallas as pl
from jax.experimental.pallas import tpu as pltpu


def _pointwise_conv_kernel(x_ref, w_ref, b_ref, o_ref):
    """One (batch, spatial) tile of the pointwise conv.

    x_ref : [1, Cin,  TS]   activation tile (lanes = spatial)
    w_ref : [Cout, Cin]     weight, PyTorch orientation (VMEM-resident)
    b_ref : [Cout, 1]       bias (VMEM-resident, broadcast over lanes)
    o_ref : [1, Cout, TS]   output tile (lane-dense, unpadded)
    """
    x = x_ref[0]                                   # (Cin, TS)
    w = w_ref[...]                                 # (Cout, Cin)
    b = b_ref[...]                                 # (Cout, 1)
    y = jnp.dot(w, x, preferred_element_type=jnp.float32)   # (Cout, TS)
    o_ref[0] = (y + b).astype(o_ref.dtype)


def pointwise_conv3d(x_ncs, w, b, *, ts=8192):
    """x_ncs: [N, Cin, S] f32, w: [Cout, Cin], b: [Cout, 1] -> [N, Cout, S]."""
    N, Cin, S = x_ncs.shape
    Cout = w.shape[0]

    if S <= ts:
        ts = S            # single tile per batch; legal (block dim == array dim)
        num_s = 1
    else:
        # ts is a multiple of 128; the final partial block is masked by Pallas.
        num_s = pl.cdiv(S, ts)

    grid = (N, num_s)

    # Advisory cost estimate: tells XLA this call is memory-bound so it can
    # overlap surrounding (upstream UNet) ops with it.
    cost = pl.CostEstimate(
        flops=2 * N * S * Cin * Cout,
        transcendentals=0,
        bytes_accessed=4 * (N * Cin * S + N * Cout * S + Cin * Cout + Cout),
    )

    return pl.pallas_call(
        _pointwise_conv_kernel,
        out_shape=jax.ShapeDtypeStruct((N, Cout, S), jnp.float32),
        grid=grid,
        in_specs=[
            # Streamed activation tiles (double-buffered by the pipeline).
            pl.BlockSpec((1, Cin, ts), lambda n, s: (n, 0, s)),
            # Constant block index -> weight stays VMEM-resident.
            pl.BlockSpec((Cout, Cin), lambda n, s: (0, 0)),
            # Constant block index -> bias stays VMEM-resident.
            pl.BlockSpec((Cout, 1), lambda n, s: (0, 0)),
        ],
        out_specs=pl.BlockSpec((1, Cout, ts), lambda n, s: (n, 0, s)),
        compiler_params=pltpu.CompilerParams(
            # Independent (batch, spatial) tiles -> shard across TensorCores
            # on v7x; neutral on v5e/v6e.
            dimension_semantics=("parallel", "parallel"),
        ),
        cost_estimate=cost,
    )(x_ncs, w, b)


def init_out_conv_params(key, in_ch, out_ch):
    """PyTorch Conv3d(k=1) default init: uniform(+-1/sqrt(fan_in)), fan_in = Cin.

    Returns weight in PyTorch orientation [Cout, Cin] (Conv3d weight with the
    three singleton spatial dims squeezed) and bias [Cout].
    """
    kw_, kb_ = jax.random.split(key)
    bound = 1.0 / jnp.sqrt(jnp.float32(in_ch))
    w = jax.random.uniform(kw_, (out_ch, in_ch), jnp.float32, -bound, bound)
    b = jax.random.uniform(kb_, (out_ch,), jnp.float32, -bound, bound)
    return w, b


@jax.jit
def out_conv_forward(x_ncdhw, weight, bias):
    """x_ncdhw: [N, Cin, D, H, W] (PyTorch layout) -> [N, Cout, D, H, W].

    weight: [Cout, Cin] (PyTorch Conv3d weight squeezed), bias: [Cout].
    """
    N, Cin, D, H, W = x_ncdhw.shape
    Cout = weight.shape[0]
    S = D * H * W
    x = x_ncdhw.astype(jnp.float32).reshape(N, Cin, S)        # free reshape
    y = pointwise_conv3d(x, weight, bias.reshape(Cout, 1))    # Pallas hot path
    return y.reshape(N, Cout, D, H, W)                        # free reshape


if __name__ == "__main__":
    key = jax.random.PRNGKey(0)
    k_x, k_p = jax.random.split(key)

    # Small UNet3D-style shapes: batch=2, in_ch=4, out_ch=2 classes, 8^3 volume.
    N, Cin, Cout, D, H, W = 2, 4, 2, 8, 8, 8
    x = jax.random.normal(k_x, (N, Cin, D, H, W), jnp.float32)

    w, b = init_out_conv_params(k_p, Cin, Cout)

    out = out_conv_forward(x, w, b)
    out = jax.block_until_ready(out)

    # Pure-JAX reference: 1x1x1 conv == channel contraction + bias (NCDHW-native).
    ref = jnp.einsum("ncdhw,oc->nodhw", x, w) + b.reshape(1, Cout, 1, 1, 1)

    assert out.shape == (N, Cout, D, H, W), out.shape
    assert jnp.all(jnp.isfinite(out))
    assert jnp.allclose(out, ref, rtol=1e-5, atol=1e-5), float(
        jnp.max(jnp.abs(out - ref))
    )
    print("KERNEL_OK")
</pallas_src>

<mosaic_0001>
module attributes {stable_mosaic.version = 11 : i64} {
  func.func @_pointwise_conv_kernel(%arg0: i32, %arg1: i32, %arg2: memref<1x4x512xf32, #tpu.memory_space<vmem>>, %arg3: memref<2x4xf32, #tpu.memory_space<vmem>>, %arg4: memref<2x1xf32, #tpu.memory_space<vmem>>, %arg5: memref<1x2x512xf32, #tpu.memory_space<vmem>>) attributes {dimension_semantics = [#tpu.dimension_semantics<parallel>, #tpu.dimension_semantics<parallel>], iteration_bounds = array<i64: 2, 1>, scalar_prefetch = 0 : i64, scratch_operands = 0 : i64, tpu.core_type = #tpu.core_type<tc>, window_params = [{transform_indices = @transform_0, window_bounds = array<i64: 1, 4, 512>}, {pipeline_mode = #tpu.pipeline_mode<synchronous>, transform_indices = @transform_1, window_bounds = array<i64: 2, 4>}, {pipeline_mode = #tpu.pipeline_mode<synchronous>, transform_indices = @transform_2, window_bounds = array<i64: 2, 1>}, {transform_indices = @transform_3, window_bounds = array<i64: 1, 2, 512>}]} {
    %c0 = arith.constant 0 : index
    %c0_0 = arith.constant 0 : index
    %c0_1 = arith.constant 0 : index
    %0 = vector.load %arg2[%c0, %c0_0, %c0_1] : memref<1x4x512xf32, #tpu.memory_space<vmem>>, vector<1x4x512xf32>
    %1 = vector.shape_cast %0 : vector<1x4x512xf32> to vector<4x512xf32>
    %c0_2 = arith.constant 0 : index
    %c0_3 = arith.constant 0 : index
    %2 = vector.load %arg3[%c0_2, %c0_3] : memref<2x4xf32, #tpu.memory_space<vmem>>, vector<2x4xf32>
    %c0_4 = arith.constant 0 : index
    %c0_5 = arith.constant 0 : index
    %3 = vector.load %arg4[%c0_4, %c0_5] : memref<2x1xf32, #tpu.memory_space<vmem>>, vector<2x1xf32>
    %cst = arith.constant dense<0.000000e+00> : vector<2x512xf32>
    %4 = tpu.matmul %2, %1, %cst {dimension_numbers = #tpu.dot_dimension_numbers<[1], [0], [0], [1], [0, 0, 1, 1], [], []>} : vector<2x4xf32>, vector<4x512xf32>, vector<2x512xf32> -> vector<2x512xf32>
    %5 = vector.broadcast %3 : vector<2x1xf32> to vector<2x512xf32>
    %6 = arith.addf %4, %5 : vector<2x512xf32>
    %c0_6 = arith.constant 0 : index
    %c0_7 = arith.constant 0 : index
    %c0_8 = arith.constant 0 : index
    %7 = vector.load %arg5[%c0_6, %c0_7, %c0_8] : memref<1x2x512xf32, #tpu.memory_space<vmem>>, vector<1x2x512xf32>
    %8 = vector.shape_cast %7 : vector<1x2x512xf32> to vector<2x512xf32>
    %9 = vector.shape_cast %6 : vector<2x512xf32> to vector<1x2x512xf32>
    tpu.vector_store %arg5[%c0_6, %c0_7, %c0_8], %9 {strides = array<i32>} : memref<1x2x512xf32, #tpu.memory_space<vmem>>, vector<1x2x512xf32>,
    return
  }
  func.func @transform_0(%arg0: i32, %arg1: i32) -> (i32, i32, i32) {
    %c0_i32 = arith.constant 0 : i32
    %c0_i32_0 = arith.constant 0 : i32
    return %arg0, %c0_i32, %arg1 : i32, i32, i32
  }
  func.func @transform_1(%arg0: i32, %arg1: i32) -> (i32, i32) {
    %c0_i32 = arith.constant 0 : i32
    %c0_i32_0 = arith.constant 0 : i32
    %c0_i32_1 = arith.constant 0 : i32
    return %c0_i32, %c0_i32_0 : i32, i32
  }
  func.func @transform_2(%arg0: i32, %arg1: i32) -> (i32, i32) {
    %c0_i32 = arith.constant 0 : i32
    %c0_i32_0 = arith.constant 0 : i32
    %c0_i32_1 = arith.constant 0 : i32
    return %c0_i32, %c0_i32_0 : i32, i32
  }
  func.func @transform_3(%arg0: i32, %arg1: i32) -> (i32, i32, i32) {
    %c0_i32 = arith.constant 0 : i32
    %c0_i32_0 = arith.constant 0 : i32
    return %arg0, %c0_i32, %arg1 : i32, i32, i32
  }
}

</mosaic_0001>

<llo_original>
// kernel: out_conv_forward.1
$region0: #{out_conv_forward.1}
  #allocation0 [shape = 'u32[]', space=smem, size = 0x4, offset = 0x4, fixed_abs, tag = 'smem constant byte address 0x4 - core index']
  #allocation1 [shape = 'u32[72,128]{1,0:T(1,128)}', space=vmem, size = 0x9000, scoped, tag = 'internal scratch']
  %s0 = inlined_call_operand.vmem [shape: f32[2,4,512], index: 0, kind: input, shape index: {}]
  %s1 = inlined_call_operand.vmem [shape: f32[2,4], index: 1, kind: input, shape index: {}]
  %s2 = inlined_call_operand.vmem [shape: f32[2,1], index: 2, kind: input, shape index: {}]
  %s3 = inlined_call_operand.vmem [shape: f32[2,2,512], index: 3, kind: output, shape index: {}]
  %s4 = sld [smem:[#allocation0]]
  $region45: #{out_conv_forward.1} parent=0
    _
  %s6 = ssub.s32 1, %s4
  %s7 = scalar_select 0, %s6, %s4
  loop: start=0, step=1, limit=4
  $region2: #{out_conv_forward.1} parent=0 // loop_pre_header
    _
  $region3: #{out_conv_forward.1} parent=0 // loop_header
    %s9 = sphi 0, %s13
    %p10 = scmp.ge.s32.totalorder %s9, 4
    %s16 = sphi 0, %s28
    %s17 = sphi 0, %s24
    %s18 = sphi 0, %s16
    %s19 = sphi 0, %s17
    %s20 = sphi 0, %s18
    %s21 = sphi 0, %s19
    %s33 = sphi 0, %s35
    %s36 = sphi 0, %s33
    %s37 = sphi 0, %s36
    %s53 = sphi 0, %s37
    %s57 = sphi 0, %s57
    %s59 = sphi 0, %s57
    %s60 = sphi 0, %s59
    %s74 = sphi 0, %s60
    %s78 = sphi 0, %s78
    %s80 = sphi 0, %s78
    %s81 = sphi 0, %s80
    %s95 = sphi 0, %s81
    %s103 = sphi 0, %s105
    %s106 = sphi 0, %s103
    %s107 = sphi 0, %s106
    %s123 = sphi 0, %s107
  $region4: #{out_conv_forward.1} parent=0 // loop_header_branch
    %12 = sbr.rel (%p10) target = $region8
  $region5: #{out_conv_forward.1} parent=0 // loop_body
    %s14 = ssub.s32 %s9, 1
    %s15 = ssub.s32 %s9, 2
    %s22 = sadd.s32 1, %s17
    %p23 = scmp.ge.s32.totalorder %s22, 1
    %s24 = scalar_select %p23, 0, %s22
    %s25 = sadd.s32 1, %s16
    %s26 = scalar_select %p23, %s25, %s16
    %p27 = scmp.ge.s32.totalorder %s26, 2
    %s28 = scalar_select %p27, 0, %s26
    %s29 = ssub.s32 %s16, %s28
    %s30 = ssub.s32 %s17, %s24
    %s31 = sor.u32 %s29, %s30
    %p32 = scmp.eq.s32.totalorder %s31, 0
    %s34 = sadd.s32 %s33, 1
    %s35 = scalar_select %p32, %s33, %s34
    %p38 = pneg %p32
    %p39 = scmp.eq.s32.totalorder %s9, 1
    %p40 = por %p38, %p39
    %p41 = scmp.ne.s32.totalorder %s33, %s36
    %p42 = scmp.eq.s32.totalorder %s9, 0
    %p43 = por %p41, %p42
    %p44 = scmp.ne.s32.totalorder %s33, %s36
    %p45 = scmp.eq.s32.totalorder %s14, 1
    %p46 = por %p44, %p45
    %p47 = scmp.ne.s32.totalorder %s36, %s37
    %p48 = scmp.eq.s32.totalorder %s14, 0
    %p49 = por %p47, %p48
    %p50 = scmp.ne.s32.totalorder %s36, %s37
    %p51 = scmp.eq.s32.totalorder %s15, 1
    %p52 = por %p50, %p51
    %p54 = scmp.ne.s32.totalorder %s37, %s53
    %p55 = scmp.eq.s32.totalorder %s15, 0
    %p56 = por %p54, %p55
    %s58 = sadd.s32 %s57, 1
    %p61 = scmp.eq.s32.totalorder %s9, 1
    %p62 = scmp.ne.s32.totalorder %s57, %s59
    %p63 = scmp.eq.s32.totalorder %s9, 0
    %p64 = por %p62, %p63
    %p65 = scmp.ne.s32.totalorder %s57, %s59
    %p66 = scmp.eq.s32.totalorder %s14, 1
    %p67 = por %p65, %p66
    %p68 = scmp.ne.s32.totalorder %s59, %s60
    %p69 = scmp.eq.s32.totalorder %s14, 0
    %p70 = por %p68, %p69
    %p71 = scmp.ne.s32.totalorder %s59, %s60
    %p72 = scmp.eq.s32.totalorder %s15, 1
    %p73 = por %p71, %p72
    %p75 = scmp.ne.s32.totalorder %s60, %s74
    %p76 = scmp.eq.s32.totalorder %s15, 0
    %p77 = por %p75, %p76
    %s79 = sadd.s32 %s78, 1
    %p82 = scmp.eq.s32.totalorder %s9, 1
    %p83 = scmp.ne.s32.totalorder %s78, %s80
    %p84 = scmp.eq.s32.totalorder %s9, 0
    %p85 = por %p83, %p84
    %p86 = scmp.ne.s32.totalorder %s78, %s80
    %p87 = scmp.eq.s32.totalorder %s14, 1
    %p88 = por %p86, %p87
    %p89 = scmp.ne.s32.totalorder %s80, %s81
    %p90 = scmp.eq.s32.totalorder %s14, 0
    %p91 = por %p89, %p90
    %p92 = scmp.ne.s32.totalorder %s80, %s81
    %p93 = scmp.eq.s32.totalorder %s15, 1
    %p94 = por %p92, %p93
    %p96 = scmp.ne.s32.totalorder %s81, %s95
    %p97 = scmp.eq.s32.totalorder %s15, 0
    %p98 = por %p96, %p97
    %s99 = ssub.s32 %s16, %s28
    %s100 = ssub.s32 %s17, %s24
    %s101 = sor.u32 %s99, %s100
    %p102 = scmp.eq.s32.totalorder %s101, 0
    %s104 = sadd.s32 %s103, 1
    %s105 = scalar_select %p102, %s103, %s104
    %p108 = pneg %p102
    %p109 = scmp.eq.s32.totalorder %s9, 1
    %p110 = por %p108, %p109
    %p111 = scmp.ne.s32.totalorder %s103, %s106
    %p112 = scmp.eq.s32.totalorder %s9, 0
    %p113 = por %p111, %p112
    %p114 = scmp.ne.s32.totalorder %s103, %s106
    %p115 = scmp.eq.s32.totalorder %s14, 1
    %p116 = por %p114, %p115
    %p117 = scmp.ne.s32.totalorder %s106, %s107
    %p118 = scmp.eq.s32.totalorder %s14, 0
    %p119 = por %p117, %p118
    %p120 = scmp.ne.s32.totalorder %s106, %s107
    %p121 = scmp.eq.s32.totalorder %s15, 1
    %p122 = por %p120, %p121
    %p124 = scmp.ne.s32.totalorder %s107, %s123
    %p125 = scmp.eq.s32.totalorder %s15, 0
    %p126 = por %p124, %p125
    %p127 = scmp.le.s32.totalorder 1, %s9
    %p128 = scmp.lt.s32.totalorder %s9, 3
    %p129 = pnand %p127, %p128
    %p130 = pneg %p129
    // Predicated region
    $region9: #{out_conv_forward.1} parent=5 // pred_check
      _
    $region10: #{out_conv_forward.1} parent=5 // pred_check_branch
      %132 = sbr.rel (%p129) target = $region12
    $region11: #{out_conv_forward.1} parent=5 // pred_region
      %s133 = ssub.s32 %s9, 1
      // Predicated region
      $region13: #{out_conv_forward.1} parent=11 // pred_check
        %p134 = pneg %p70
      $region14: #{out_conv_forward.1} parent=11 // pred_check_branch
        %136 = sbr.rel (%p134) target = $region16
      $region15: #{out_conv_forward.1} parent=11 // pred_region
        _
      $region16: #{out_conv_forward.1} parent=11 // pred_fallthru
        _
      // Predicated region
      $region17: #{out_conv_forward.1} parent=11 // pred_check
        %p137 = pneg %p91
      $region18: #{out_conv_forward.1} parent=11 // pred_check_branch
        %139 = sbr.rel (%p137) target = $region20
      $region19: #{out_conv_forward.1} parent=11 // pred_region
        _
      $region20: #{out_conv_forward.1} parent=11 // pred_fallthru
        _
    $region12: #{out_conv_forward.1} parent=5 // pred_fallthru
      _
    %p140 = scmp.lt.s32.totalorder %s9, 2
    // Predicated region
    $region21: #{out_conv_forward.1} parent=5 // pred_check
      %p141 = pneg %p140
    $region22: #{out_conv_forward.1} parent=5 // pred_check_branch
      %143 = sbr.rel (%p141) target = $region24
    $region23: #{out_conv_forward.1} parent=5 // pred_region
      // Predicated region
      $region25: #{out_conv_forward.1} parent=23 // pred_check
        %p144 = pneg %p43
      $region26: #{out_conv_forward.1} parent=23 // pred_check_branch
        %146 = sbr.rel (%p144) target = $region28
      $region27: #{out_conv_forward.1} parent=23 // pred_region
        %s147 = smul.u32 4, %s17
        %p148 = scmp.lt.s32.totalorder %s16, 1
        %s149 = scalar_select %p148, %s16, 1
        %p150 = scmp.lt.s32.totalorder %s147, 3
        %s151 = scalar_select %p150, %s147, 3
        %s152 = smul.addr %s149, 4
        %s153 = sadd.s32 %s151, %s152
        %s154 = smul.addr %s153, 4
        %s155 = scalar_lea.vmem %s0, %s154
        %s156 = smul.u32 4, %s17
      $region28: #{out_conv_forward.1} parent=23 // pred_fallthru
        _
    $region24: #{out_conv_forward.1} parent=5 // pred_fallthru
      _
    %p157 = scmp.le.s32.totalorder 1, %s9
    %p158 = scmp.lt.s32.totalorder %s9, 3
    %p159 = pnand %p157, %p158
    %p160 = pneg %p159
    // Predicated region
    $region29: #{out_conv_forward.1} parent=5 // pred_check
      _
    $region30: #{out_conv_forward.1} parent=5 // pred_check_branch
      %162 = sbr.rel (%p159) target = $region32
    $region31: #{out_conv_forward.1} parent=5 // pred_region
      %s163 = ssub.s32 %s9, 1
      %s164 = smul.u32 4, %s19
      %p165 = scmp.lt.s32.totalorder %s18, 1
      %s166 = scalar_select %p165, %s18, 1
      %p167 = scmp.lt.s32.totalorder %s164, 3
      %s168 = scalar_select %p167, %s164, 3
      %s169 = smul.addr %s166, 4
      %s170 = sadd.s32 %s168, %s169
      %s171 = smul.addr %s170, 4
      %s172 = scalar_lea.vmem %s0, %s171
      %p173 = pneg %p49
      %p174 = pneg %p46
      %p175 = pneg %p70
      %p176 = pneg %p67
      %p177 = pneg %p91
      %p178 = pneg %p88
      %p179 = pneg %p119
      %p180 = pneg %p116
      %s181 = smul.u32 4, %s19
      %p182 = scmp.lt.s32.totalorder %s18, 1
      %s183 = scalar_select %p182, %s18, 1
      %p184 = scmp.lt.s32.totalorder %s181, 3
      %s185 = scalar_select %p184, %s181, 3
      %s186 = smul.addr %s183, 4
      %s187 = sadd.s32 %s185, %s186
      %s188 = smul.addr %s187, 2
      %s189 = scalar_lea.vmem %s3, %s188
      %s190 = smul.u32 4, %s19
      %p191 = scmp.lt.s32.totalorder %s18, 1
      %s192 = scalar_select %p191, %s18, 1
      %p193 = scmp.lt.s32.totalorder %s190, 3
      %s194 = scalar_select %p193, %s190, 3
      %s195 = smul.addr %s192, 4
      %s196 = sadd.s32 %s194, %s195
      %s197 = smul.addr %s196, 4
      %s198 = scalar_lea.vmem %s0, %s197
      %s199 = smul.u32 4, %s19
      %s200 = smul.u32 4, %s19
      %p201 = scmp.lt.s32.totalorder %s18, 1
      %s202 = scalar_select %p201, %s18, 1
      %p203 = scmp.lt.s32.totalorder %s200, 3
      %s204 = scalar_select %p203, %s200, 3
      %s205 = smul.addr %s202, 4
      %s206 = sadd.s32 %s204, %s205
      %s207 = smul.addr %s206, 2
      %s208 = scalar_lea.vmem %s3, %s207
      %s209 = smul.u32 4, %s19
      %v210 = vld [vmem:[%s198] sm:$0xff]
      %v211 = vld [vmem:[%s198 + $0x8] sm:$0xff]
      %v212 = vld [vmem:[%s1] sm:$0x3]
      %v213 = vld [vmem:[%s2] sm:$0x3]
      %215 = vset.pattern.permute.xlu0 0
      %216 = vperm.xlu0 %215, %v213
      %v217 = vpop.permute.xlu0 %216
      %221 = vst [vmem:[#allocation1] ss:$2 sm:$0xff] %v210
      %s222 = scalar_lea.vmem [#allocation1], 16
      %223 = vst [vmem:[%s222] ss:$2 sm:$0xff] %v211
      %v224 = vld.sshfl [vmem:[#allocation1] sm:$0xff pattern:$0x75316420]
      %v225 = vld.sshfl [vmem:[#allocation1 + $0x8] sm:$0xff pattern:$0x75316420]
      %v226 = vld.sshfl [vmem:[#allocation1 + $0x10] sm:$0xff pattern:$0x75316420]
      %v227 = vld.sshfl [vmem:[#allocation1 + $0x18] sm:$0xff pattern:$0x75316420]
      %vm228 = vcmask 31744
      %v230 = vsel %vm228, %v212, 0
      %vm232 = vcmask 1043456
      %v233 = vsel %vm232, %v224, 0
      %v235 = vsel %vm232, %v225, 0
      %v237 = vsel %vm232, %v226, 0
      %v239 = vsel %vm232, %v227, 0
      %241 = vmatpush.msra.mxu0 0.0
      %242 = vmatpush.msra.mxu0 0.0
      %243 = vmatpush.msra.mxu0 0.0
      %244 = vmatpush.msra.mxu0 0.0
      %245 = vmatpush.msra.mxu0 0.0
      %246 = vmatpush.msra.mxu0 0.0
      %247 = vmatpush.msra.mxu0 0.0
      %248 = vmatpush.msra.mxu0 0.0
      %249 = vmatpush.msra.mxu0 0.0
      %250 = vmatpush.msra.mxu0 0.0
      %251 = vmatpush.msra.mxu0 0.0
      %252 = vmatpush.msra.mxu0 0.0
      %253 = vmatpush.msra.mxu0 0.0
      %254 = vmatpush.msra.mxu0 0.0
      %255 = vmatpush.msra.mxu0 0.0
      %256 = vmatpush.msra.mxu0 %v233
      %257 = vmatmul.f32.gmra.mxu0 %v230
      %v258 = vpop.f32.mrf.mxu0
      %v259 = vadd.f32 %v217, %v258
      %260 = vdwg.mxu0
      %261 = vmatpush.msra.mxu0 0.0
      %262 = vmatpush.msra.mxu0 0.0
      %263 = vmatpush.msra.mxu0 0.0
      %264 = vmatpush.msra.mxu0 0.0
      %265 = vmatpush.msra.mxu0 0.0
      %266 = vmatpush.msra.mxu0 0.0
      %267 = vmatpush.msra.mxu0 0.0
      %268 = vmatpush.msra.mxu0 0.0
      %269 = vmatpush.msra.mxu0 0.0
      %270 = vmatpush.msra.mxu0 0.0
      %271 = vmatpush.msra.mxu0 0.0
      %272 = vmatpush.msra.mxu0 0.0
      %273 = vmatpush.msra.mxu0 0.0
      %274 = vmatpush.msra.mxu0 0.0
      %275 = vmatpush.msra.mxu0 0.0
      %276 = vmatpush.msra.mxu0 %v235
      %277 = vmatmul.f32.gmra.mxu0 %v230
      %v278 = vpop.f32.mrf.mxu0
      %v279 = vadd.f32 %v217, %v278
      %280 = vdwg.mxu0
      %281 = vmatpush.msra.mxu0 0.0
      %282 = vmatpush.msra.mxu0 0.0
      %283 = vmatpush.msra.mxu0 0.0
      %284 = vmatpush.msra.mxu0 0.0
      %285 = vmatpush.msra.mxu0 0.0
      %286 = vmatpush.msra.mxu0 0.0
      %287 = vmatpush.msra.mxu0 0.0
      %288 = vmatpush.msra.mxu0 0.0
      %289 = vmatpush.msra.mxu0 0.0
      %290 = vmatpush.msra.mxu0 0.0
      %291 = vmatpush.msra.mxu0 0.0
      %292 = vmatpush.msra.mxu0 0.0
      %293 = vmatpush.msra.mxu0 0.0
      %294 = vmatpush.msra.mxu0 0.0
      %295 = vmatpush.msra.mxu0 0.0
      %296 = vmatpush.msra.mxu0 %v237
      %297 = vmatmul.f32.gmra.mxu0 %v230
      %v298 = vpop.f32.mrf.mxu0
      %v299 = vadd.f32 %v217, %v298
      %300 = vdwg.mxu0
      %301 = vmatpush.msra.mxu0 0.0
      %302 = vmatpush.msra.mxu0 0.0
      %303 = vmatpush.msra.mxu0 0.0
      %304 = vmatpush.msra.mxu0 0.0
      %305 = vmatpush.msra.mxu0 0.0
      %306 = vmatpush.msra.mxu0 0.0
      %307 = vmatpush.msra.mxu0 0.0
      %308 = vmatpush.msra.mxu0 0.0
      %309 = vmatpush.msra.mxu0 0.0
      %310 = vmatpush.msra.mxu0 0.0
      %311 = vmatpush.msra.mxu0 0.0
      %312 = vmatpush.msra.mxu0 0.0
      %313 = vmatpush.msra.mxu0 0.0
      %314 = vmatpush.msra.mxu0 0.0
      %315 = vmatpush.msra.mxu0 0.0
      %316 = vmatpush.msra.mxu0 %v239
      %317 = vmatmul.f32.gmra.mxu0 %v230
      %v318 = vpop.f32.mrf.mxu0
      %v319 = vadd.f32 %v217, %v318
      %320 = vdwg.mxu0
      %v325 = vrot.slane %v279, 6
      %v326 = vrot.slane %v299, 4
      %v327 = vrot.slane %v319, 2
      %vm328 = vcmask 1041408
      %v329 = vsel %vm328, %v259, %v325
      %vm330 = vcmask 1045508
      %v331 = vsel %vm330, %v326, %v327
      %v332 = vsel %vm232, %v329, %v331
      %334 = vst [vmem:[%s208] sm:$0xff] %v332
      %s335 = smul.u32 4, %s19
      %p336 = scmp.lt.s32.totalorder %s18, 1
      %s337 = scalar_select %p336, %s18, 1
      %p338 = scmp.lt.s32.totalorder %s335, 3
      %s339 = scalar_select %p338, %s335, 3
      %s340 = smul.addr %s337, 4
      %s341 = sadd.s32 %s339, %s340
      %s342 = smul.addr %s341, 2
      %s343 = scalar_lea.vmem %s3, %s342
      // Predicated region
      $region33: #{out_conv_forward.1} parent=31 // pred_check
        %p344 = pneg %p116
      $region34: #{out_conv_forward.1} parent=31 // pred_check_branch
        %346 = sbr.rel (%p344) target = $region36
      $region35: #{out_conv_forward.1} parent=31 // pred_region
        %s347 = smul.u32 4, %s19
      $region36: #{out_conv_forward.1} parent=31 // pred_fallthru
        _
    $region32: #{out_conv_forward.1} parent=5 // pred_fallthru
      _
    %p348 = scmp.le.s32.totalorder 2, %s9
    // Predicated region
    $region37: #{out_conv_forward.1} parent=5 // pred_check
      %p349 = pneg %p348
    $region38: #{out_conv_forward.1} parent=5 // pred_check_branch
      %351 = sbr.rel (%p349) target = $region40
    $region39: #{out_conv_forward.1} parent=5 // pred_region
      %s352 = ssub.s32 %s9, 2
      // Predicated region
      $region41: #{out_conv_forward.1} parent=39 // pred_check
        %p353 = pneg %p122
      $region42: #{out_conv_forward.1} parent=39 // pred_check_branch
        %355 = sbr.rel (%p353) target = $region44
      $region43: #{out_conv_forward.1} parent=39 // pred_region
        %s356 = smul.u32 4, %s21
        %p357 = scmp.lt.s32.totalorder %s20, 1
        %s358 = scalar_select %p357, %s20, 1
        %p359 = scmp.lt.s32.totalorder %s356, 3
        %s360 = scalar_select %p359, %s356, 3
        %s361 = smul.addr %s358, 4
        %s362 = sadd.s32 %s360, %s361
        %s363 = smul.addr %s362, 2
        %s364 = scalar_lea.vmem %s3, %s363
      $region44: #{out_conv_forward.1} parent=39 // pred_fallthru
        _
    $region40: #{out_conv_forward.1} parent=5 // pred_fallthru
      _
  $region6: #{out_conv_forward.1} parent=0 // loop_footer
    %s13 = sadd.s32 1, %s9
  $region7: #{out_conv_forward.1} parent=0 // loop_footer_branch
    %8 = sbr.rel target = $region3
  $region8: #{out_conv_forward.1} parent=0 // loop_exit
    _

</llo_original>
